<compile_context>
chip_gen: v7x
topology: tpu7x:2x2x1
jax: 0.10.0
libtpu: 0.0.40
codegen_flags: <defaults>
</compile_context>

<pallas_src>
import functools

import jax
import jax.numpy as jnp
from jax.experimental import pallas as pl
from jax.experimental.pallas import tpu as pltpu


def _round_up(x, m):
    return ((x + m - 1) // m) * m


# -----------------------------------------------------------------------------
# Fused kernel: K-layer LightGCN propagation + gather + dot-product scoring
# -----------------------------------------------------------------------------
def _lightgcn_kernel(adj_ref, emb_ref, idx_ref, logits_ref,
                     x_ref, xn_ref, acc_ref, *, num_layers, inv_scale, tm):
    # adj_ref:    (TM, N)    bf16 normalized-adjacency row tile (streamed)
    # emb_ref:    (N, D)     f32 node embeddings (resident, constant index map)
    # idx_ref:    (2P, 1)    int32 [user_idx ; item_idx]
    # logits_ref: (1, P)     f32 lane-dense scores
    # x_ref:      (N, D)     bf16 scratch, layer-k input
    # xn_ref:     (N, D)     bf16 scratch, layer-(k+1) output
    # acc_ref:    (N, D)     f32 scratch, unscaled sum_k x_k
    k = pl.program_id(0)            # propagation layer   (slow axis)
    i = pl.program_id(1)            # adjacency row tile  (fast axis)
    nt = pl.num_programs(1)

    # --- first step: load embeddings into layer-input + accumulator ---------
    @pl.when((k == 0) & (i == 0))
    def _():
        e = emb_ref[...]
        acc_ref[...] = e                           # unscaled x0 term
        x_ref[...] = e.astype(jnp.bfloat16)        # bf16 MXU operand

    # --- one row tile of x_{k+1} = A_norm @ x_k  (bf16 x bf16 -> f32 acc) ---
    row = pl.multiple_of(i * tm, tm)
    y = jnp.dot(adj_ref[...], x_ref[...], preferred_element_type=jnp.float32)
    xn_ref[pl.ds(row, tm), :] = y.astype(jnp.bfloat16)
    acc_ref[pl.ds(row, tm), :] = acc_ref[pl.ds(row, tm), :] + y   # unscaled

    # --- end of layer: x <- x_next -------------------------------------------
    @pl.when(i == nt - 1)
    def _():
        x_ref[...] = xn_ref[...]

    # --- final step: fused one-hot gather + scoring, lane-dense store --------
    @pl.when((k == num_layers - 1) & (i == nt - 1))
    def _():
        n = acc_ref.shape[0]
        two_p = idx_ref.shape[0]
        p = two_p // 2
        lane_ids = jax.lax.broadcasted_iota(jnp.int32, (two_p, n), 1)
        # fold the uniform layer weight 1/(K+1) into the one-hot values
        onehot = jnp.where(lane_ids == idx_ref[...],
                           jnp.float32(inv_scale), jnp.float32(0.0))   # (2P, N)
        g = jnp.dot(onehot, acc_ref[...],
                    preferred_element_type=jnp.float32)                # (2P, D)
        prod = g[:p, :] * g[p:, :]                                     # (P, D)
        # XLU transpose + sublane reduce -> lane-dense (1, P) unmasked store
        logits_ref[...] = jnp.sum(jnp.transpose(prod), axis=0, keepdims=True)


# -----------------------------------------------------------------------------
# Per-graph preprocessing (build ONCE per graph and reuse across forwards)
# -----------------------------------------------------------------------------
def build_normalized_adjacency(edge_index, num_nodes):
    """Dense symmetric-normalized adjacency D^-1/2 A D^-1/2 (f32)."""
    row, col = edge_index[0], edge_index[1]
    ones = jnp.ones(row.shape[0], jnp.float32)
    deg = jnp.zeros((num_nodes,), jnp.float32).at[col].add(ones)
    deg_inv_sqrt = jnp.where(deg > 0.0,
                             jax.lax.rsqrt(jnp.maximum(deg, 1e-12)), 0.0)
    w = deg_inv_sqrt[row] * deg_inv_sqrt[col]
    # messages flow source (row) -> target (col):  out[i] = sum_j adj[i, j] x[j]
    return jnp.zeros((num_nodes, num_nodes), jnp.float32).at[col, row].add(w)


def prepare_adjacency_for_kernel(adj):
    """Pad to a multiple of 128 and cast to bf16 (halves HBM traffic)."""
    n = adj.shape[0]
    n_pad = _round_up(n, 128)
    return jnp.pad(adj, ((0, n_pad - n), (0, n_pad - n))).astype(jnp.bfloat16)


# -----------------------------------------------------------------------------
# My_LightGCN.forward  (Pallas-backed)
# -----------------------------------------------------------------------------
@functools.partial(jax.jit, static_argnames=("num_layers",))
def my_lightgcn_forward(adj_pad, embedding_weight, batch, num_layers=3):
    n_pad = adj_pad.shape[0]
    num_nodes, emb_dim = embedding_weight.shape
    bsz, num_per, _ = batch.shape
    num_pairs = bsz * num_per

    d_pad = _round_up(emb_dim, 128)
    p_pad = _round_up(num_pairs, 128)          # lane-dense logits row

    emb_p = jnp.pad(embedding_weight.astype(jnp.float32),
                    ((0, n_pad - num_nodes), (0, d_pad - emb_dim)))

    user_idx = batch[:, :, 0].reshape(-1).astype(jnp.int32)
    item_idx = batch[:, :, 1].reshape(-1).astype(jnp.int32)
    pair_idx = jnp.concatenate(
        [jnp.pad(user_idx, (0, p_pad - num_pairs)),
         jnp.pad(item_idx, (0, p_pad - num_pairs))]).reshape(2 * p_pad, 1)

    # adjacency row-tile size: biggest aligned tile that divides n_pad
    tm = next(t for t in (512, 256, 128) if n_pad % t == 0)
    nt = n_pad // tm

    kernel = functools.partial(_lightgcn_kernel, num_layers=num_layers,
                               inv_scale=1.0 / (num_layers + 1), tm=tm)

    flops = (2 * num_layers * n_pad * n_pad * d_pad
             + 2 * (2 * p_pad) * n_pad * d_pad)
    bytes_accessed = (num_layers * n_pad * n_pad * 2   # bf16 adj streamed per layer
                      + n_pad * d_pad * 4              # embeddings
                      + 2 * p_pad * 4 + p_pad * 4)     # indices + logits

    vmem_need = (2 * tm * n_pad * 2                    # double-buffered adj tiles
                 + 2 * n_pad * d_pad * 4               # embedding block
                 + n_pad * d_pad * (2 + 2 + 4)         # x / x_next / acc scratch
                 + 2 * (2 * p_pad) * n_pad * 4         # one-hot intermediate
                 + 4 * (2 * p_pad + p_pad) * 4)
    vmem_limit = int(min(max(2 * vmem_need, 4 << 20), 64 << 20))

    logits = pl.pallas_call(
        kernel,
        out_shape=jax.ShapeDtypeStruct((1, p_pad), jnp.float32),
        grid_spec=pltpu.PrefetchScalarGridSpec(
            num_scalar_prefetch=0,
            grid=(num_layers, nt),
            in_specs=[
                pl.BlockSpec((tm, n_pad), lambda k, i: (i, 0)),      # adj tile
                pl.BlockSpec((n_pad, d_pad), lambda k, i: (0, 0)),   # embeddings
                pl.BlockSpec((2 * p_pad, 1), lambda k, i: (0, 0)),   # pair indices
            ],
            out_specs=pl.BlockSpec((1, p_pad), lambda k, i: (0, 0)),
            scratch_shapes=[
                pltpu.VMEM((n_pad, d_pad), jnp.bfloat16),   # x_k
                pltpu.VMEM((n_pad, d_pad), jnp.bfloat16),   # x_{k+1}
                pltpu.VMEM((n_pad, d_pad), jnp.float32),    # unscaled sum_k x_k
            ]),
        compiler_params=pltpu.CompilerParams(
            # Both axes carry scratch-state dependencies -> sequential.
            dimension_semantics=("arbitrary", "arbitrary"),
            vmem_limit_bytes=vmem_limit),
        cost_estimate=pl.CostEstimate(flops=flops, transcendentals=0,
                                      bytes_accessed=bytes_accessed),
    )(adj_pad, emb_p, pair_idx)

    return logits[0, :num_pairs].reshape(bsz, num_per)


# -----------------------------------------------------------------------------
# pure-JAX reference for correctness checking
# -----------------------------------------------------------------------------
def _reference_forward(embedding_weight, edge_index, batch, num_layers=3):
    adj = build_normalized_adjacency(edge_index, embedding_weight.shape[0])
    x = embedding_weight
    out = x / (num_layers + 1)
    for _ in range(num_layers):
        x = adj @ x
        out = out + x / (num_layers + 1)
    u = out[batch[:, :, 0].reshape(-1)]
    it = out[batch[:, :, 1].reshape(-1)]
    return (u * it).sum(-1).reshape(batch.shape[0], -1)


if __name__ == "__main__":
    key = jax.random.PRNGKey(0)
    k_emb, k_u, k_i, k_bu, k_bi = jax.random.split(key, 5)

    # small, shape-consistent synthetic problem
    num_users, num_items = 48, 80
    num_nodes = num_users + num_items            # 128 nodes
    emb_dim = 64                                 # LightGCN(num_nodes, 64, 3)
    num_layers = 3
    num_interactions = 300
    batch_size, num_neg = 4, 7                   # batch: (4, 8, 3)

    # embedding table (xavier-uniform-like init, matches LightGCN reset)
    bound = (6.0 / (num_nodes + emb_dim)) ** 0.5
    embedding_weight = jax.random.uniform(
        k_emb, (num_nodes, emb_dim), jnp.float32, -bound, bound)

    # bipartite interaction graph, both edge directions
    u_src = jax.random.randint(k_u, (num_interactions,), 0, num_users)
    i_dst = jax.random.randint(k_i, (num_interactions,), 0, num_items) + num_users
    edge_index = jnp.stack([jnp.concatenate([u_src, i_dst]),
                            jnp.concatenate([i_dst, u_src])]).astype(jnp.int32)

    # batch[:, :, 0] = user node ids, batch[:, :, 1] = item node ids
    b_users = jax.random.randint(k_bu, (batch_size, 1 + num_neg), 0, num_users)
    b_items = jax.random.randint(k_bi, (batch_size, 1 + num_neg), 0, num_items) + num_users
    b_label = jnp.zeros((batch_size, 1 + num_neg), jnp.int32)
    batch = jnp.stack([b_users, b_items, b_label], axis=-1).astype(jnp.int32)

    # adjacency built, padded and bf16-cast ONCE per graph (hoisted/cacheable)
    adj = build_normalized_adjacency(edge_index, num_nodes)
    adj_pad = prepare_adjacency_for_kernel(adj)
    jax.block_until_ready(adj_pad)

    logits = my_lightgcn_forward(adj_pad, embedding_weight, batch,
                                 num_layers=num_layers)
    jax.block_until_ready(logits)
    assert logits.shape == (batch_size, 1 + num_neg)

    ref = _reference_forward(embedding_weight, edge_index, batch, num_layers)
    # bf16 MXU operands over 3 propagation hops -> compare against the f32
    # reference with a bf16-appropriate tolerance (observed error << 1e-2).
    assert jnp.allclose(logits, ref, atol=1e-2, rtol=1e-2), (
        "pallas output mismatch vs reference")

    print("KERNEL_OK")
</pallas_src>

<mosaic_0001>
module attributes {stable_mosaic.version = 11 : i64} {
  func.func @_lightgcn_kernel(%arg0: i32, %arg1: i32, %arg2: memref<128x128xbf16, #tpu.memory_space<vmem>>, %arg3: memref<128x128xf32, #tpu.memory_space<vmem>>, %arg4: memref<256x1xi32, #tpu.memory_space<vmem>>, %arg5: memref<1x128xf32, #tpu.memory_space<vmem>>, %arg6: memref<128x128xbf16, #tpu.memory_space<vmem>>, %arg7: memref<128x128xbf16, #tpu.memory_space<vmem>>, %arg8: memref<128x128xf32, #tpu.memory_space<vmem>>) attributes {dimension_semantics = [#tpu.dimension_semantics<arbitrary>, #tpu.dimension_semantics<arbitrary>], iteration_bounds = array<i64: 3, 1>, scalar_prefetch = 0 : i64, scratch_operands = 3 : i64, tpu.core_type = #tpu.core_type<tc>, window_params = [{transform_indices = @transform_0, window_bounds = array<i64: 128, 128>}, {pipeline_mode = #tpu.pipeline_mode<synchronous>, transform_indices = @transform_1, window_bounds = array<i64: 128, 128>}, {pipeline_mode = #tpu.pipeline_mode<synchronous>, transform_indices = @transform_2, window_bounds = array<i64: 256, 1>}, {pipeline_mode = #tpu.pipeline_mode<synchronous>, transform_indices = @transform_3, window_bounds = array<i64: 1, 128>}]} {
    %c0_i32 = arith.constant 0 : i32
    %0 = arith.cmpi eq, %arg0, %c0_i32 : i32
    %c0_i32_0 = arith.constant 0 : i32
    %1 = arith.cmpi eq, %arg1, %c0_i32_0 : i32
    %2 = arith.andi %0, %1 : i1
    %3 = arith.extui %2 : i1 to i32
    %c0_i32_1 = arith.constant 0 : i32
    %4 = arith.cmpi ne, %3, %c0_i32_1 : i32
    scf.if %4 {
      %c0_12 = arith.constant 0 : index
      %c0_13 = arith.constant 0 : index
      %26 = vector.load %arg3[%c0_12, %c0_13] : memref<128x128xf32, #tpu.memory_space<vmem>>, vector<128x128xf32>
      %c0_14 = arith.constant 0 : index
      %c0_15 = arith.constant 0 : index
      %27 = vector.load %arg8[%c0_14, %c0_15] : memref<128x128xf32, #tpu.memory_space<vmem>>, vector<128x128xf32>
      tpu.vector_store %arg8[%c0_14, %c0_15], %26 {strides = array<i32>} : memref<128x128xf32, #tpu.memory_space<vmem>>, vector<128x128xf32>,
      %28 = arith.truncf %26 : vector<128x128xf32> to vector<128x128xbf16>
      %c0_16 = arith.constant 0 : index
      %c0_17 = arith.constant 0 : index
      %29 = vector.load %arg6[%c0_16, %c0_17] : memref<128x128xbf16, #tpu.memory_space<vmem>>, vector<128x128xbf16>
      tpu.vector_store %arg6[%c0_16, %c0_17], %28 {strides = array<i32>} : memref<128x128xbf16, #tpu.memory_space<vmem>>, vector<128x128xbf16>,
    } else {
    }
    %c128_i32 = arith.constant 128 : i32
    %5 = arith.muli %arg1, %c128_i32 : i32
    %6 = tpu.assume_multiple %5, 128 : i32
    %c0 = arith.constant 0 : index
    %c0_2 = arith.constant 0 : index
    %7 = vector.load %arg2[%c0, %c0_2] : memref<128x128xbf16, #tpu.memory_space<vmem>>, vector<128x128xbf16>
    %c0_3 = arith.constant 0 : index
    %c0_4 = arith.constant 0 : index
    %8 = vector.load %arg6[%c0_3, %c0_4] : memref<128x128xbf16, #tpu.memory_space<vmem>>, vector<128x128xbf16>
    %cst = arith.constant dense<0.000000e+00> : vector<128x128xf32>
    %9 = tpu.matmul %7, %8, %cst {dimension_numbers = #tpu.dot_dimension_numbers<[1], [0], [0], [1], [0, 0, 1, 1], [], []>} : vector<128x128xbf16>, vector<128x128xbf16>, vector<128x128xf32> -> vector<128x128xf32>
    %10 = arith.truncf %9 : vector<128x128xf32> to vector<128x128xbf16>
    %11 = arith.index_cast %6 : i32 to index
    %c0_5 = arith.constant 0 : index
    %12 = vector.load %arg7[%11, %c0_5] : memref<128x128xbf16, #tpu.memory_space<vmem>>, vector<128x128xbf16>
    tpu.vector_store %arg7[%11, %c0_5], %10 {strides = array<i32>} : memref<128x128xbf16, #tpu.memory_space<vmem>>, vector<128x128xbf16>,
    %13 = arith.index_cast %6 : i32 to index
    %c0_6 = arith.constant 0 : index
    %14 = vector.load %arg8[%13, %c0_6] : memref<128x128xf32, #tpu.memory_space<vmem>>, vector<128x128xf32>
    %15 = arith.addf %14, %9 : vector<128x128xf32>
    %16 = arith.index_cast %6 : i32 to index
    %c0_7 = arith.constant 0 : index
    %17 = vector.load %arg8[%16, %c0_7] : memref<128x128xf32, #tpu.memory_space<vmem>>, vector<128x128xf32>
    tpu.vector_store %arg8[%16, %c0_7], %15 {strides = array<i32>} : memref<128x128xf32, #tpu.memory_space<vmem>>, vector<128x128xf32>,
    %c0_i32_8 = arith.constant 0 : i32
    %18 = arith.cmpi eq, %arg1, %c0_i32_8 : i32
    %19 = arith.extui %18 : i1 to i32
    %c0_i32_9 = arith.constant 0 : i32
    %20 = arith.cmpi ne, %19, %c0_i32_9 : i32
    scf.if %20 {
      %c0_12 = arith.constant 0 : index
      %c0_13 = arith.constant 0 : index
      %26 = vector.load %arg7[%c0_12, %c0_13] : memref<128x128xbf16, #tpu.memory_space<vmem>>, vector<128x128xbf16>
      %c0_14 = arith.constant 0 : index
      %c0_15 = arith.constant 0 : index
      %27 = vector.load %arg6[%c0_14, %c0_15] : memref<128x128xbf16, #tpu.memory_space<vmem>>, vector<128x128xbf16>
      tpu.vector_store %arg6[%c0_14, %c0_15], %26 {strides = array<i32>} : memref<128x128xbf16, #tpu.memory_space<vmem>>, vector<128x128xbf16>,
    } else {
    }
    %c2_i32 = arith.constant 2 : i32
    %21 = arith.cmpi eq, %arg0, %c2_i32 : i32
    %c0_i32_10 = arith.constant 0 : i32
    %22 = arith.cmpi eq, %arg1, %c0_i32_10 : i32
    %23 = arith.andi %21, %22 : i1
    %24 = arith.extui %23 : i1 to i32
    %c0_i32_11 = arith.constant 0 : i32
    %25 = arith.cmpi ne, %24, %c0_i32_11 : i32
    scf.if %25 {
      %26 = tpu.iota {dimensions = array<i32: 1>} : vector<256x128xi32>
      %c0_12 = arith.constant 0 : index
      %c0_13 = arith.constant 0 : index
      %27 = vector.load %arg4[%c0_12, %c0_13] : memref<256x1xi32, #tpu.memory_space<vmem>>, vector<256x1xi32>
      %28 = vector.broadcast %27 : vector<256x1xi32> to vector<256x128xi32>
      %29 = arith.cmpi eq, %26, %28 : vector<256x128xi32>
      %cst_14 = arith.constant 2.500000e-01 : f32
      %cst_15 = arith.constant 0.000000e+00 : f32
      %30 = vector.broadcast %cst_14 : f32 to vector<256x128xf32>
      %31 = vector.broadcast %cst_15 : f32 to vector<256x128xf32>
      %32 = arith.select %29, %30, %31 : vector<256x128xi1>, vector<256x128xf32>
      %c0_16 = arith.constant 0 : index
      %c0_17 = arith.constant 0 : index
      %33 = vector.load %arg8[%c0_16, %c0_17] : memref<128x128xf32, #tpu.memory_space<vmem>>, vector<128x128xf32>
      %cst_18 = arith.constant dense<0.000000e+00> : vector<256x128xf32>
      %34 = tpu.matmul %32, %33, %cst_18 {dimension_numbers = #tpu.dot_dimension_numbers<[1], [0], [0], [1], [0, 0, 1, 1], [], []>} : vector<256x128xf32>, vector<128x128xf32>, vector<256x128xf32> -> vector<256x128xf32>
      %35 = vector.extract_strided_slice %34 {offsets = [0, 0], sizes = [128, 128], strides = [1, 1]} : vector<256x128xf32> to vector<128x128xf32>
      %36 = vector.extract_strided_slice %34 {offsets = [128, 0], sizes = [128, 128], strides = [1, 1]} : vector<256x128xf32> to vector<128x128xf32>
      %37 = arith.mulf %35, %36 : vector<128x128xf32>
      %38 = tpu.transpose %37, [1, 0] : vector<128x128xf32> -> vector<128x128xf32>
      %cst_19 = arith.constant dense<0.000000e+00> : vector<128xf32>
      %39 = vector.multi_reduction <add>, %38, %cst_19 [0] : vector<128x128xf32> to vector<128xf32>
      %40 = vector.shape_cast %39 : vector<128xf32> to vector<1x128xf32>
      %c0_20 = arith.constant 0 : index
      %c0_21 = arith.constant 0 : index
      %41 = vector.load %arg5[%c0_20, %c0_21] : memref<1x128xf32, #tpu.memory_space<vmem>>, vector<1x128xf32>
      tpu.vector_store %arg5[%c0_20, %c0_21], %40 {strides = array<i32>} : memref<1x128xf32, #tpu.memory_space<vmem>>, vector<1x128xf32>,
    } else {
    }
    return
  }
  func.func @transform_0(%arg0: i32, %arg1: i32) -> (i32, i32) {
    %c0_i32 = arith.constant 0 : i32
    %c0_i32_0 = arith.constant 0 : i32
    return %arg1, %c0_i32 : i32, i32
  }
  func.func @transform_1(%arg0: i32, %arg1: i32) -> (i32, i32) {
    %c0_i32 = arith.constant 0 : i32
    %c0_i32_0 = arith.constant 0 : i32
    %c0_i32_1 = arith.constant 0 : i32
    return %c0_i32, %c0_i32_0 : i32, i32
  }
  func.func @transform_2(%arg0: i32, %arg1: i32) -> (i32, i32) {
    %c0_i32 = arith.constant 0 : i32
    %c0_i32_0 = arith.constant 0 : i32
    %c0_i32_1 = arith.constant 0 : i32
    return %c0_i32, %c0_i32_0 : i32, i32
  }
  func.func @transform_3(%arg0: i32, %arg1: i32) -> (i32, i32) {
    %c0_i32 = arith.constant 0 : i32
    %c0_i32_0 = arith.constant 0 : i32
    %c0_i32_1 = arith.constant 0 : i32
    return %c0_i32, %c0_i32_0 : i32, i32
  }
}

</mosaic_0001>

<llo_original>
// kernel: squeeze.3
$region0: #{squeeze.3}
  %s0 = inlined_call_operand.vmem [shape: s32[4,8,1], index: 0, kind: input, shape index: {}]
  %s1 = inlined_call_operand.vmem [shape: s32[32], index: 1, kind: output, shape index: {}]
  $region1: #{squeeze.3} parent=0
    #allocation0 [shape = 'u8[4096]{0}', space=vmem, size = 0x1000, scoped, tag = 'scoped mem for output reshape']
    #allocation1 [shape = 'u8[4096]{0}', space=vmem, size = 0x1000, scoped, tag = 'scoped mem for input reshape']
    %s3 = sshllo.u32 0, 4
    %v4 = vld [vmem:[%s0] sm:%s3]
    %5 = vst [vmem:[#allocation1] sm:%s3] %v4
    %v6 = vld [vmem:[#allocation1] sm:$0x1]
    %vm7 = vcmask 64512
    %8 = vst.msk [vmem:[#allocation0] sm:$0x1] %vm7, %v6
    %s9 = scalar_lea.vmem [#allocation1], 3
    %v10 = vld [vmem:[%s9] sm:$0x1]
    %11 = vrot.lane.b32.xlu0 %v10, 24
    %v12 = vpop.permute.xlu0 %11
    %vm13 = vcmask 261312
    %14 = vst.msk [vmem:[#allocation0] sm:$0x1] %vm13, %v12
    %s15 = scalar_lea.vmem [#allocation1], 2
    %v16 = vld [vmem:[%s15] sm:$0x1]
    %17 = vrot.lane.b32.xlu0 %v16, 16
    %v18 = vpop.permute.xlu0 %17
    %vm19 = vcmask 195712
    %20 = vst.msk [vmem:[#allocation0] sm:$0x1] %vm19, %v18
    %s21 = scalar_lea.vmem [#allocation1], 1
    %v22 = vld [vmem:[%s21] sm:$0x1]
    %23 = vrot.lane.b32.xlu0 %v22, 8
    %v24 = vpop.permute.xlu0 %23
    %vm25 = vcmask 130112
    %26 = vst.msk [vmem:[#allocation0] sm:$0x1] %vm25, %v24
    %s28 = sshllo.u32 0, 1
    %v30 = vld [vmem:[#allocation0] sm:%s28]
    %s31 = sshllo.u32 0, 1
    %32 = vst [vmem:[%s1] sm:%s31] %v30

// kernel: squeeze.5
$region0: #{squeeze.5}
  %s0 = inlined_call_operand.vmem [shape: f32[32], index: 0, kind: input, shape index: {}]
  %s1 = inlined_call_operand.hbm [shape: f32[4,8], index: 1, kind: output, shape index: {}]
  $region1: #{squeeze.5} parent=0
    #allocation0 [shape = 'u8[2048]{0}', space=vmem, size = 0x800, scoped, tag = 'operand span for operand 1']
    #allocation1 [shape = 's32[1]{0}', space=sflag, size = 0x4, scoped, tag = 'scoped memory for squeeze.5']
    #allocation2 [shape = 'u8[4096]{0}', space=vmem, size = 0x1000, scoped, tag = 'scoped mem for output reshape']
    #allocation3 [shape = 'u8[4096]{0}', space=vmem, size = 0x1000, scoped, tag = 'scoped mem for input reshape']
    %2 = vsyncpa [#allocation1], 0
    %s4 = sshllo.u32 0, 1
    %v5 = vld [vmem:[%s0] sm:%s4]
    %6 = vst [vmem:[#allocation3] sm:%s4] %v5
    %v7 = vld [vmem:[#allocation3] sm:$0x1]
    %vm8 = vcmask 64512
    %9 = vst.msk [vmem:[#allocation2] sm:$0x1] %vm8, %v7
    %v10 = vld [vmem:[#allocation3] sm:$0x1]
    %11 = vrot.lane.b32.xlu0 %v10, 120
    %v12 = vpop.permute.xlu0 %11
    %vm13 = vcmask 64512
    %s14 = scalar_lea.vmem [#allocation2], 1
    %15 = vst.msk [vmem:[%s14] sm:$0x1] %vm13, %v12
    %v16 = vld [vmem:[#allocation3] sm:$0x1]
    %17 = vrot.lane.b32.xlu0 %v16, 112
    %v18 = vpop.permute.xlu0 %17
    %vm19 = vcmask 64512
    %s20 = scalar_lea.vmem [#allocation2], 2
    %21 = vst.msk [vmem:[%s20] sm:$0x1] %vm19, %v18
    %v22 = vld [vmem:[#allocation3] sm:$0x1]
    %23 = vrot.lane.b32.xlu0 %v22, 104
    %v24 = vpop.permute.xlu0 %23
    %vm25 = vcmask 64512
    %s26 = scalar_lea.vmem [#allocation2], 3
    %27 = vst.msk [vmem:[%s26] sm:$0x1] %vm25, %v24
    %s29 = sshllo.u32 0, 4
    %v31 = vld [vmem:[#allocation2] sm:%s29]
    %s32 = sshllo.u32 0, 4
    %33 = vst [vmem:[#allocation0] sm:%s32] %v31
    %s35 = ssub.s32 64, 64
    %36 = vsyncadd [#allocation1], %s35
    %s38 = sshll.u32 [#allocation0], 4
    %s39 = int_to_ptr.vmem [resolvable:$true] %s38
    %41 = dma.vmem_to_hbm [thread:$0]  %s39, 64, %s1, [#allocation1]
    %42 = dma.done [#allocation1], 64
    %43 = vsyncpa [#allocation1], 1

// kernel: my_lightgcn_forward.1
$region0: #{my_lightgcn_forward.1}
  #allocation0 [shape = 'u32[]', space=smem, size = 0x4, offset = 0x4, fixed_abs, tag = 'smem constant byte address 0x4 - core index']
  #allocation1 [shape = 'u32[144,128]{1,0:T(1,128)}', space=vmem, size = 0x12000, scoped, tag = 'internal scratch']
  #allocation2 [shape = 'bf16[128,128]{1,0:T(16,128)(2,1)}', space=vmem, size = 0x8000, scoped, tag = 'scratch operand']
  #allocation3 [shape = 'bf16[128,128]{1,0:T(16,128)(2,1)}', space=vmem, size = 0x8000, scoped, tag = 'scratch operand']
  #allocation4 [shape = 'f32[128,128]{1,0:T(8,128)}', space=vmem, size = 0x10000, scoped, tag = 'scratch operand']
  %s0 = inlined_call_operand.vmem [shape: bf16[128,128], index: 0, kind: input, shape index: {}]
  %s1 = inlined_call_operand.vmem [shape: f32[128,128], index: 1, kind: input, shape index: {}]
  %s2 = inlined_call_operand.vmem [shape: s32[256,1], index: 2, kind: input, shape index: {}]
  %s3 = inlined_call_operand.vmem [shape: f32[1,128], index: 3, kind: output, shape index: {}]
  %s4 = sld [smem:[#allocation0]]
  $region57: #{my_lightgcn_forward.1} parent=0
    _
  %s6 = ssub.s32 1, %s4
  %s7 = scalar_select 0, %s6, %s4
  loop: start=0, step=1, limit=5
  $region2: #{my_lightgcn_forward.1} parent=0 // loop_pre_header
    _
  $region3: #{my_lightgcn_forward.1} parent=0 // loop_header
    %s9 = sphi 0, %s13
    %p10 = scmp.ge.s32.totalorder %s9, 5
    %s16 = sphi 0, %s28
    %s17 = sphi 0, %s24
    %s18 = sphi 0, %s16
    %s19 = sphi 0, %s17
    %s20 = sphi 0, %s18
    %s21 = sphi 0, %s19
    %s31 = sphi 0, %s33
    %s34 = sphi 0, %s31
    %s35 = sphi 0, %s34
    %s51 = sphi 0, %s35
    %s55 = sphi 0, %s55
    %s57 = sphi 0, %s55
    %s58 = sphi 0, %s57
    %s72 = sphi 0, %s58
    %s76 = sphi 0, %s76
    %s78 = sphi 0, %s76
    %s79 = sphi 0, %s78
    %s93 = sphi 0, %s79
    %s97 = sphi 0, %s97
    %s99 = sphi 0, %s97
    %s100 = sphi 0, %s99
    %s114 = sphi 0, %s100
  $region4: #{my_lightgcn_forward.1} parent=0 // loop_header_branch
    %12 = sbr.rel (%p10) target = $region8
  $region5: #{my_lightgcn_forward.1} parent=0 // loop_body
    %s14 = ssub.s32 %s9, 1
    %s15 = ssub.s32 %s9, 2
    %s22 = sadd.s32 1, %s17
    %p23 = scmp.ge.s32.totalorder %s22, 1
    %s24 = scalar_select %p23, 0, %s22
    %s25 = sadd.s32 1, %s16
    %s26 = scalar_select %p23, %s25, %s16
    %p27 = scmp.ge.s32.totalorder %s26, 3
    %s28 = scalar_select %p27, 0, %s26
    %s29 = ssub.s32 %s17, %s24
    %p30 = scmp.eq.s32.totalorder %s29, 0
    %s32 = sadd.s32 %s31, 1
    %s33 = scalar_select %p30, %s31, %s32
    %p36 = pneg %p30
    %p37 = scmp.eq.s32.totalorder %s9, 2
    %p38 = por %p36, %p37
    %p39 = scmp.ne.s32.totalorder %s31, %s34
    %p40 = scmp.eq.s32.totalorder %s9, 0
    %p41 = por %p39, %p40
    %p42 = scmp.ne.s32.totalorder %s31, %s34
    %p43 = scmp.eq.s32.totalorder %s14, 2
    %p44 = por %p42, %p43
    %p45 = scmp.ne.s32.totalorder %s34, %s35
    %p46 = scmp.eq.s32.totalorder %s14, 0
    %p47 = por %p45, %p46
    %p48 = scmp.ne.s32.totalorder %s34, %s35
    %p49 = scmp.eq.s32.totalorder %s15, 2
    %p50 = por %p48, %p49
    %p52 = scmp.ne.s32.totalorder %s35, %s51
    %p53 = scmp.eq.s32.totalorder %s15, 0
    %p54 = por %p52, %p53
    %s56 = sadd.s32 %s55, 1
    %p59 = scmp.eq.s32.totalorder %s9, 2
    %p60 = scmp.ne.s32.totalorder %s55, %s57
    %p61 = scmp.eq.s32.totalorder %s9, 0
    %p62 = por %p60, %p61
    %p63 = scmp.ne.s32.totalorder %s55, %s57
    %p64 = scmp.eq.s32.totalorder %s14, 2
    %p65 = por %p63, %p64
    %p66 = scmp.ne.s32.totalorder %s57, %s58
    %p67 = scmp.eq.s32.totalorder %s14, 0
    %p68 = por %p66, %p67
    %p69 = scmp.ne.s32.totalorder %s57, %s58
    %p70 = scmp.eq.s32.totalorder %s15, 2
    %p71 = por %p69, %p70
    %p73 = scmp.ne.s32.totalorder %s58, %s72
    %p74 = scmp.eq.s32.totalorder %s15, 0
    %p75 = por %p73, %p74
    %s77 = sadd.s32 %s76, 1
    %p80 = scmp.eq.s32.totalorder %s9, 2
    %p81 = scmp.ne.s32.totalorder %s76, %s78
    %p82 = scmp.eq.s32.totalorder %s9, 0
    %p83 = por %p81, %p82
    %p84 = scmp.ne.s32.totalorder %s76, %s78
    %p85 = scmp.eq.s32.totalorder %s14, 2
    %p86 = por %p84, %p85
    %p87 = scmp.ne.s32.totalorder %s78, %s79
    %p88 = scmp.eq.s32.totalorder %s14, 0
    %p89 = por %p87, %p88
    %p90 = scmp.ne.s32.totalorder %s78, %s79
    %p91 = scmp.eq.s32.totalorder %s15, 2
    %p92 = por %p90, %p91
    %p94 = scmp.ne.s32.totalorder %s79, %s93
    %p95 = scmp.eq.s32.totalorder %s15, 0
    %p96 = por %p94, %p95
    %s98 = sadd.s32 %s97, 1
    %p101 = scmp.eq.s32.totalorder %s9, 2
    %p102 = scmp.ne.s32.totalorder %s97, %s99
    %p103 = scmp.eq.s32.totalorder %s9, 0
    %p104 = por %p102, %p103
    %p105 = scmp.ne.s32.totalorder %s97, %s99
    %p106 = scmp.eq.s32.totalorder %s14, 2
    %p107 = por %p105, %p106
    %p108 = scmp.ne.s32.totalorder %s99, %s100
    %p109 = scmp.eq.s32.totalorder %s14, 0
    %p110 = por %p108, %p109
    %p111 = scmp.ne.s32.totalorder %s99, %s100
    %p112 = scmp.eq.s32.totalorder %s15, 2
    %p113 = por %p111, %p112
    %p115 = scmp.ne.s32.totalorder %s100, %s114
    %p116 = scmp.eq.s32.totalorder %s15, 0
    %p117 = por %p115, %p116
    %p118 = scmp.le.s32.totalorder 1, %s9
    %p119 = scmp.lt.s32.totalorder %s9, 4
    %p120 = pnand %p118, %p119
    %p121 = pneg %p120
    // Predicated region
    $region9: #{my_lightgcn_forward.1} parent=5 // pred_check
      _
    $region10: #{my_lightgcn_forward.1} parent=5 // pred_check_branch
      %123 = sbr.rel (%p120) target = $region12
    $region11: #{my_lightgcn_forward.1} parent=5 // pred_region
      %s124 = ssub.s32 %s9, 1
      // Predicated region
      $region13: #{my_lightgcn_forward.1} parent=11 // pred_check
        %p125 = pneg %p47
      $region14: #{my_lightgcn_forward.1} parent=11 // pred_check_branch
        %127 = sbr.rel (%p125) target = $region16
      $region15: #{my_lightgcn_forward.1} parent=11 // pred_region
        %s128 = smul.u32 16, %s19
        %p129 = scmp.lt.s32.totalorder %s128, 15
        %s130 = scalar_select %p129, %s128, 15
        %s131 = smul.addr %s130, 4
        %s132 = scalar_lea.vmem %s0, %s131
        %s133 = smul.u32 16, %s19
      $region16: #{my_lightgcn_forward.1} parent=11 // pred_fallthru
        _
      // Predicated region
      $region17: #{my_lightgcn_forward.1} parent=11 // pred_check
        %p134 = pneg %p68
      $region18: #{my_lightgcn_forward.1} parent=11 // pred_check_branch
        %136 = sbr.rel (%p134) target = $region20
      $region19: #{my_lightgcn_forward.1} parent=11 // pred_region
        _
      $region20: #{my_lightgcn_forward.1} parent=11 // pred_fallthru
        _
      // Predicated region
      $region21: #{my_lightgcn_forward.1} parent=11 // pred_check
        %p137 = pneg %p89
      $region22: #{my_lightgcn_forward.1} parent=11 // pred_check_branch
        %139 = sbr.rel (%p137) target = $region24
      $region23: #{my_lightgcn_forward.1} parent=11 // pred_region
        _
      $region24: #{my_lightgcn_forward.1} parent=11 // pred_fallthru
        _
    $region12: #{my_lightgcn_forward.1} parent=5 // pred_fallthru
      _
    %p140 = scmp.lt.s32.totalorder %s9, 3
    // Predicated region
    $region25: #{my_lightgcn_forward.1} parent=5 // pred_check
      %p141 = pneg %p140
    $region26: #{my_lightgcn_forward.1} parent=5 // pred_check_branch
      %143 = sbr.rel (%p141) target = $region28
    $region27: #{my_lightgcn_forward.1} parent=5 // pred_region
      _
    $region28: #{my_lightgcn_forward.1} parent=5 // pred_fallthru
      _
    %p144 = scmp.le.s32.totalorder 1, %s9
    %p145 = scmp.lt.s32.totalorder %s9, 4
    %p146 = pnand %p144, %p145
    %p147 = pneg %p146
    // Predicated region
    $region29: #{my_lightgcn_forward.1} parent=5 // pred_check
      _
    $region30: #{my_lightgcn_forward.1} parent=5 // pred_check_branch
      %149 = sbr.rel (%p146) target = $region32
    $region31: #{my_lightgcn_forward.1} parent=5 // pred_region
      %s150 = ssub.s32 %s9, 1
      %s151 = smul.u32 16, %s19
      %p152 = scmp.lt.s32.totalorder %s151, 15
      %s153 = scalar_select %p152, %s151, 15
      %s154 = smul.addr %s153, 4
      %s155 = scalar_lea.vmem %s0, %s154
      %p156 = pneg %p47
      %p157 = pneg %p44
      %p158 = pneg %p68
      %p159 = pneg %p65
      %p160 = pneg %p89
      %p161 = pneg %p86
      %p162 = pneg %p110
      %p163 = pneg %p107
      %s164 = smul.u32 16, %s19
      %p165 = scmp.lt.s32.totalorder %s164, 15
      %s166 = scalar_select %p165, %s164, 15
      %s167 = smul.addr %s166, 4
      %s168 = scalar_lea.vmem %s0, %s167
      %s169 = smul.u32 16, %s19
      %p171 = scmp.eq.s32.totalorder %s18, 0
      %p172 = scmp.eq.s32.totalorder %s19, 0
      %p173 = pnand %p171, %p172
      %p174 = pneg %p173
      // Predicated region
      $region33: #{my_lightgcn_forward.1} parent=31 // pred_check
        _
      $region34: #{my_lightgcn_forward.1} parent=31 // pred_check_branch
        %176 = sbr.rel (%p173) target = $region36
      $region35: #{my_lightgcn_forward.1} parent=31 // pred_region
        %v177 = vld [vmem:[%s1] sm:$0xff]
        %v178 = vld [vmem:[%s1 + $0x8] sm:$0xff]
        %v179 = vld [vmem:[%s1 + $0x10] sm:$0xff]
        %v180 = vld [vmem:[%s1 + $0x18] sm:$0xff]
        %v181 = vld [vmem:[%s1 + $0x20] sm:$0xff]
        %v182 = vld [vmem:[%s1 + $0x28] sm:$0xff]
        %v183 = vld [vmem:[%s1 + $0x30] sm:$0xff]
        %v184 = vld [vmem:[%s1 + $0x38] sm:$0xff]
        %v185 = vld [vmem:[%s1 + $0x40] sm:$0xff]
        %v186 = vld [vmem:[%s1 + $0x48] sm:$0xff]
        %v187 = vld [vmem:[%s1 + $0x50] sm:$0xff]
        %v188 = vld [vmem:[%s1 + $0x58] sm:$0xff]
        %v189 = vld [vmem:[%s1 + $0x60] sm:$0xff]
        %v190 = vld [vmem:[%s1 + $0x68] sm:$0xff]
        %v191 = vld [vmem:[%s1 + $0x70] sm:$0xff]
        %v192 = vld [vmem:[%s1 + $0x78] sm:$0xff]
        %193 = vst [vmem:[#allocation4] sm:$0xff] %v177
        %194 = vst [vmem:[#allocation4 + $0x8] sm:$0xff] %v178
        %195 = vst [vmem:[#allocation4 + $0x10] sm:$0xff] %v179
        %196 = vst [vmem:[#allocation4 + $0x18] sm:$0xff] %v180
        %197 = vst [vmem:[#allocation4 + $0x20] sm:$0xff] %v181
        %198 = vst [vmem:[#allocation4 + $0x28] sm:$0xff] %v182
        %199 = vst [vmem:[#allocation4 + $0x30] sm:$0xff] %v183
        %200 = vst [vmem:[#allocation4 + $0x38] sm:$0xff] %v184
        %201 = vst [vmem:[#allocation4 + $0x40] sm:$0xff] %v185
        %202 = vst [vmem:[#allocation4 + $0x48] sm:$0xff] %v186
        %203 = vst [vmem:[#allocation4 + $0x50] sm:$0xff] %v187
        %204 = vst [vmem:[#allocation4 + $0x58] sm:$0xff] %v188
        %205 = vst [vmem:[#allocation4 + $0x60] sm:$0xff] %v189
        %206 = vst [vmem:[#allocation4 + $0x68] sm:$0xff] %v190
        %207 = vst [vmem:[#allocation4 + $0x70] sm:$0xff] %v191
        %208 = vst [vmem:[#allocation4 + $0x78] sm:$0xff] %v192
        %v209 = vpack.c.bf16 %v178, %v177
        %v210 = vpack.c.bf16 %v180, %v179
        %v211 = vpack.c.bf16 %v182, %v181
        %v212 = vpack.c.bf16 %v184, %v183
        %v213 = vpack.c.bf16 %v186, %v185
        %v214 = vpack.c.bf16 %v188, %v187
        %v215 = vpack.c.bf16 %v190, %v189
        %v216 = vpack.c.bf16 %v192, %v191
        %217 = vst [vmem:[#allocation2] sm:$0xff] %v209
        %218 = vst [vmem:[#allocation2 + $0x8] sm:$0xff] %v210
        %219 = vst [vmem:[#allocation2 + $0x10] sm:$0xff] %v211
        %220 = vst [vmem:[#allocation2 + $0x18] sm:$0xff] %v212
        %221 = vst [vmem:[#allocation2 + $0x20] sm:$0xff] %v213
        %222 = vst [vmem:[#allocation2 + $0x28] sm:$0xff] %v214
        %223 = vst [vmem:[#allocation2 + $0x30] sm:$0xff] %v215
        %224 = vst [vmem:[#allocation2 + $0x38] sm:$0xff] %v216
      $region36: #{my_lightgcn_forward.1} parent=31 // pred_fallthru
        _
      %s225 = smul.u32 %s19, 128
      %v226 = vld [vmem:[%s168] sm:$0xf]
      %v227 = vld [vmem:[%s168 + $0x4] sm:$0xf]
      %v228 = vld [vmem:[%s168 + $0x8] sm:$0xf]
      %v229 = vld [vmem:[%s168 + $0xc] sm:$0xf]
      %v230 = vld [vmem:[%s168 + $0x10] sm:$0xf]
      %v231 = vld [vmem:[%s168 + $0x14] sm:$0xf]
      %v232 = vld [vmem:[%s168 + $0x18] sm:$0xf]
      %v233 = vld [vmem:[%s168 + $0x1c] sm:$0xf]
      %v234 = vld [vmem:[%s168 + $0x20] sm:$0xf]
      %v235 = vld [vmem:[%s168 + $0x24] sm:$0xf]
      %v236 = vld [vmem:[%s168 + $0x28] sm:$0xf]
      %v237 = vld [vmem:[%s168 + $0x2c] sm:$0xf]
      %v238 = vld [vmem:[%s168 + $0x30] sm:$0xf]
      %v239 = vld [vmem:[%s168 + $0x34] sm:$0xf]
      %v240 = vld [vmem:[%s168 + $0x38] sm:$0xf]
      %v241 = vld [vmem:[%s168 + $0x3c] sm:$0xf]
      %v242 = vld [vmem:[#allocation2] sm:$0xff]
      %v243 = vld [vmem:[#allocation2 + $0x8] sm:$0xff]
      %v244 = vld [vmem:[#allocation2 + $0x10] sm:$0xff]
      %v245 = vld [vmem:[#allocation2 + $0x18] sm:$0xff]
      %v246 = vld [vmem:[#allocation2 + $0x20] sm:$0xff]
      %v247 = vld [vmem:[#allocation2 + $0x28] sm:$0xff]
      %v248 = vld [vmem:[#allocation2 + $0x30] sm:$0xff]
      %v249 = vld [vmem:[#allocation2 + $0x38] sm:$0xff]
      %v266 = vunpack.c.l.b16 %v226
      %v267 = vunpack.c.l.b16 %v227
      %v268 = vunpack.c.l.b16 %v228
      %v269 = vunpack.c.l.b16 %v229
      %v270 = vunpack.c.l.b16 %v230
      %v271 = vunpack.c.l.b16 %v231
      %v272 = vunpack.c.l.b16 %v232
      %v273 = vunpack.c.l.b16 %v233
      %v274 = vunpack.c.l.b16 %v234
      %v275 = vunpack.c.l.b16 %v235
      %v276 = vunpack.c.l.b16 %v236
      %v277 = vunpack.c.l.b16 %v237
      %v278 = vunpack.c.l.b16 %v238
      %v279 = vunpack.c.l.b16 %v239
      %v280 = vunpack.c.l.b16 %v240
      %v281 = vunpack.c.l.b16 %v241
      %v282 = vpack.c.b16 %v267, %v266
      %v283 = vpack.c.b16 %v269, %v268
      %v284 = vpack.c.b16 %v271, %v270
      %v285 = vpack.c.b16 %v273, %v272
      %v286 = vpack.c.b16 %v275, %v274
      %v287 = vpack.c.b16 %v277, %v276
      %v288 = vpack.c.b16 %v279, %v278
      %v289 = vpack.c.b16 %v281, %v280
      %298 = vmatprep.subr.bf16.mxu0 0
      %299 = vmatpush1.bf16.msra.mxu0 %v242
      %300 = vmatprep.subr.bf16.mxu0 0
      %301 = vmatpush1.bf16.msra.mxu0 %v243
      %302 = vmatprep.subr.bf16.mxu0 0
      %303 = vmatpush1.bf16.msra.mxu0 %v244
      %304 = vmatprep.subr.bf16.mxu0 0
      %305 = vmatpush1.bf16.msra.mxu0 %v245
      %306 = vmatprep.subr.bf16.mxu0 0
      %307 = vmatpush1.bf16.msra.mxu0 %v246
      %308 = vmatprep.subr.bf16.mxu0 0
      %309 = vmatpush1.bf16.msra.mxu0 %v247
      %310 = vmatprep.subr.bf16.mxu0 0
      %311 = vmatpush1.bf16.msra.mxu0 %v248
      %312 = vmatprep.subr.bf16.mxu0 0
      %313 = vmatpush1.bf16.msra.mxu0 %v249
      %314 = vmatprep.subr.bf16.mxu0 0
      %315 = vmatpush1.bf16.msra.mxu0 0
      %316 = vmatprep.subr.bf16.mxu0 0
      %317 = vmatpush1.bf16.msra.mxu0 0
      %318 = vmatprep.subr.bf16.mxu0 0
      %319 = vmatpush1.bf16.msra.mxu0 0
      %320 = vmatprep.subr.bf16.mxu0 0
      %321 = vmatpush1.bf16.msra.mxu0 0
      %322 = vmatprep.subr.bf16.mxu0 0
      %323 = vmatpush1.bf16.msra.mxu0 0
      %324 = vmatprep.subr.bf16.mxu0 0
      %325 = vmatpush1.bf16.msra.mxu0 0
      %326 = vmatprep.subr.bf16.mxu0 0
      %327 = vmatpush1.bf16.msra.mxu0 0
      %328 = vmatprep.subr.bf16.mxu0 0
      %329 = vmatpush1.bf16.msra.mxu0 0
      %330 = vmatprep.mubr.bf16.mxu0 0
      %331 = vmatmul.mubr.bf16.gmra.mrb[0].mxu0 %v282
      %v332 = vpop.f32.mrb[0].mxu0
      %v333 = vadd.f32 0.0, %v332
      %v334 = vpop.f32.mrb[0].mxu0
      %v335 = vpop.f32.mrb[0].mxu0
      %v336 = vadd.f32 0.0, %v335
      %v337 = vpop.f32.mrb[0].mxu0
      %338 = vmatprep.mubr.bf16.mxu0 0
      %339 = vmatmul.mubr.bf16.gmra.mrb[0].mxu0 %v283
      %v340 = vpop.f32.mrb[0].mxu0
      %v341 = vadd.f32 0.0, %v340
      %v342 = vpop.f32.mrb[0].mxu0
      %v343 = vpop.f32.mrb[0].mxu0
      %v344 = vadd.f32 0.0, %v343
      %v345 = vpop.f32.mrb[0].mxu0
      %346 = vmatprep.mubr.bf16.mxu0 0
      %347 = vmatmul.mubr.bf16.gmra.mrb[0].mxu0 %v284
      %v348 = vpop.f32.mrb[0].mxu0
      %v349 = vadd.f32 0.0, %v348
      %v350 = vpop.f32.mrb[0].mxu0
      %v351 = vpop.f32.mrb[0].mxu0
      %v352 = vadd.f32 0.0, %v351
      %v353 = vpop.f32.mrb[0].mxu0
      %354 = vmatprep.mubr.bf16.mxu0 0
      %355 = vmatmul.mubr.bf16.gmra.mrb[0].mxu0 %v285
      %v356 = vpop.f32.mrb[0].mxu0
      %v357 = vadd.f32 0.0, %v356
      %v358 = vpop.f32.mrb[0].mxu0
      %v359 = vpop.f32.mrb[0].mxu0
      %v360 = vadd.f32 0.0, %v359
      %v361 = vpop.f32.mrb[0].mxu0
      %362 = vmatprep.mubr.bf16.mxu0 0
      %363 = vmatmul.mubr.bf16.gmra.mrb[0].mxu0 %v286
      %v364 = vpop.f32.mrb[0].mxu0
      %v365 = vadd.f32 0.0, %v364
      %v366 = vpop.f32.mrb[0].mxu0
      %v367 = vpop.f32.mrb[0].mxu0
      %v368 = vadd.f32 0.0, %v367
      %v369 = vpop.f32.mrb[0].mxu0
      %370 = vmatprep.mubr.bf16.mxu0 0
      %371 = vmatmul.mubr.bf16.gmra.mrb[0].mxu0 %v287
      %v372 = vpop.f32.mrb[0].mxu0
      %v373 = vadd.f32 0.0, %v372
      %v374 = vpop.f32.mrb[0].mxu0
      %v375 = vpop.f32.mrb[0].mxu0
      %v376 = vadd.f32 0.0, %v375
      %v377 = vpop.f32.mrb[0].mxu0
      %378 = vmatprep.mubr.bf16.mxu0 0
      %379 = vmatmul.mubr.bf16.gmra.mrb[0].mxu0 %v288
      %v380 = vpop.f32.mrb[0].mxu0
      %v381 = vadd.f32 0.0, %v380
      %v382 = vpop.f32.mrb[0].mxu0
      %v383 = vpop.f32.mrb[0].mxu0
      %v384 = vadd.f32 0.0, %v383
      %v385 = vpop.f32.mrb[0].mxu0
      %386 = vmatprep.mubr.bf16.mxu0 0
      %387 = vmatmul.mubr.bf16.gmra.mrb[0].mxu0 %v289
      %v388 = vpop.f32.mrb[0].mxu0
      %v389 = vadd.f32 0.0, %v388
      %v390 = vpop.f32.mrb[0].mxu0
      %v391 = vpop.f32.mrb[0].mxu0
      %v392 = vadd.f32 0.0, %v391
      %v393 = vpop.f32.mrb[0].mxu0
      %394 = vdwg.mxu0
      %v395 = vpack.c.bf16 %v336, %v333
      %v396 = vpack.c.bf16 %v344, %v341
      %v397 = vpack.c.bf16 %v352, %v349
      %v398 = vpack.c.bf16 %v360, %v357
      %v399 = vpack.c.bf16 %v368, %v365
      %v400 = vpack.c.bf16 %v376, %v373
      %v401 = vpack.c.bf16 %v384, %v381
      %v402 = vpack.c.bf16 %v392, %v389
      %s403 = sshra.s32 %s225, 4
      %s404 = sand.u32 %s225, 15
      %s405 = smul.addr %s403, 8
      %s406 = scalar_lea.vmem [#allocation3], %s405
      %407 = vst [vmem:[%s406] sm:$0xff] %v395
      %408 = vst [vmem:[%s406 + $0x8] sm:$0xff] %v396
      %409 = vst [vmem:[%s406 + $0x10] sm:$0xff] %v397
      %410 = vst [vmem:[%s406 + $0x18] sm:$0xff] %v398
      %411 = vst [vmem:[%s406 + $0x20] sm:$0xff] %v399
      %412 = vst [vmem:[%s406 + $0x28] sm:$0xff] %v400
      %413 = vst [vmem:[%s406 + $0x30] sm:$0xff] %v401
      %414 = vst [vmem:[%s406 + $0x38] sm:$0xff] %v402
      %s415 = scalar_lea.vmem [#allocation4], %s225
      %v416 = vld [vmem:[%s415] sm:$0xff]
      %v417 = vld [vmem:[%s415 + $0x8] sm:$0xff]
      %v418 = vld [vmem:[%s415 + $0x10] sm:$0xff]
      %v419 = vld [vmem:[%s415 + $0x18] sm:$0xff]
      %v420 = vld [vmem:[%s415 + $0x20] sm:$0xff]
      %v421 = vld [vmem:[%s415 + $0x28] sm:$0xff]
      %v422 = vld [vmem:[%s415 + $0x30] sm:$0xff]
      %v423 = vld [vmem:[%s415 + $0x38] sm:$0xff]
      %v424 = vld [vmem:[%s415 + $0x40] sm:$0xff]
      %v425 = vld [vmem:[%s415 + $0x48] sm:$0xff]
      %v426 = vld [vmem:[%s415 + $0x50] sm:$0xff]
      %v427 = vld [vmem:[%s415 + $0x58] sm:$0xff]
      %v428 = vld [vmem:[%s415 + $0x60] sm:$0xff]
      %v429 = vld [vmem:[%s415 + $0x68] sm:$0xff]
      %v430 = vld [vmem:[%s415 + $0x70] sm:$0xff]
      %v431 = vld [vmem:[%s415 + $0x78] sm:$0xff]
      %v432 = vadd.f32 %v416, %v333
      %v433 = vadd.f32 %v417, %v336
      %v434 = vadd.f32 %v418, %v341
      %v435 = vadd.f32 %v419, %v344
      %v436 = vadd.f32 %v420, %v349
      %v437 = vadd.f32 %v421, %v352
      %v438 = vadd.f32 %v422, %v357
      %v439 = vadd.f32 %v423, %v360
      %v440 = vadd.f32 %v424, %v365
      %v441 = vadd.f32 %v425, %v368
      %v442 = vadd.f32 %v426, %v373
      %v443 = vadd.f32 %v427, %v376
      %v444 = vadd.f32 %v428, %v381
      %v445 = vadd.f32 %v429, %v384
      %v446 = vadd.f32 %v430, %v389
      %v447 = vadd.f32 %v431, %v392
      %448 = vst [vmem:[%s415] sm:$0xff] %v432
      %449 = vst [vmem:[%s415 + $0x8] sm:$0xff] %v433
      %450 = vst [vmem:[%s415 + $0x10] sm:$0xff] %v434
      %451 = vst [vmem:[%s415 + $0x18] sm:$0xff] %v435
      %452 = vst [vmem:[%s415 + $0x20] sm:$0xff] %v436
      %453 = vst [vmem:[%s415 + $0x28] sm:$0xff] %v437
      %454 = vst [vmem:[%s415 + $0x30] sm:$0xff] %v438
      %455 = vst [vmem:[%s415 + $0x38] sm:$0xff] %v439
      %456 = vst [vmem:[%s415 + $0x40] sm:$0xff] %v440
      %457 = vst [vmem:[%s415 + $0x48] sm:$0xff] %v441
      %458 = vst [vmem:[%s415 + $0x50] sm:$0xff] %v442
      %459 = vst [vmem:[%s415 + $0x58] sm:$0xff] %v443
      %460 = vst [vmem:[%s415 + $0x60] sm:$0xff] %v444
      %461 = vst [vmem:[%s415 + $0x68] sm:$0xff] %v445
      %462 = vst [vmem:[%s415 + $0x70] sm:$0xff] %v446
      %463 = vst [vmem:[%s415 + $0x78] sm:$0xff] %v447
      // Predicated region
      $region37: #{my_lightgcn_forward.1} parent=31 // pred_check
        %p464 = pneg %p172
      $region38: #{my_lightgcn_forward.1} parent=31 // pred_check_branch
        %466 = sbr.rel (%p464) target = $region40
      $region39: #{my_lightgcn_forward.1} parent=31 // pred_region
        %v467 = vld [vmem:[#allocation3] sm:$0xff]
        %v468 = vld [vmem:[#allocation3 + $0x8] sm:$0xff]
        %v469 = vld [vmem:[#allocation3 + $0x10] sm:$0xff]
        %v470 = vld [vmem:[#allocation3 + $0x18] sm:$0xff]
        %v471 = vld [vmem:[#allocation3 + $0x20] sm:$0xff]
        %v472 = vld [vmem:[#allocation3 + $0x28] sm:$0xff]
        %v473 = vld [vmem:[#allocation3 + $0x30] sm:$0xff]
        %v474 = vld [vmem:[#allocation3 + $0x38] sm:$0xff]
        %475 = vst [vmem:[#allocation2] sm:$0xff] %v467
        %476 = vst [vmem:[#allocation2 + $0x8] sm:$0xff] %v468
        %477 = vst [vmem:[#allocation2 + $0x10] sm:$0xff] %v469
        %478 = vst [vmem:[#allocation2 + $0x18] sm:$0xff] %v470
        %479 = vst [vmem:[#allocation2 + $0x20] sm:$0xff] %v471
        %480 = vst [vmem:[#allocation2 + $0x28] sm:$0xff] %v472
        %481 = vst [vmem:[#allocation2 + $0x30] sm:$0xff] %v473
        %482 = vst [vmem:[#allocation2 + $0x38] sm:$0xff] %v474
      $region40: #{my_lightgcn_forward.1} parent=31 // pred_fallthru
        _
      %p483 = scmp.eq.s32.totalorder %s18, 2
      %p484 = pnand %p483, %p172
      %p485 = pneg %p484
      // Predicated region
      $region41: #{my_lightgcn_forward.1} parent=31 // pred_check
        _
      $region42: #{my_lightgcn_forward.1} parent=31 // pred_check_branch
        %487 = sbr.rel (%p484) target = $region44
      $region43: #{my_lightgcn_forward.1} parent=31 // pred_region
        %v488 = vlaneseq
        %v489 = vand.u32 %v488, 127
        %v490 = vld [vmem:[%s2] sm:$0xff]
        %v491 = vld [vmem:[%s2 + $0x8] sm:$0xff]
        %v492 = vld [vmem:[%s2 + $0x10] sm:$0xff]
        %v493 = vld [vmem:[%s2 + $0x18] sm:$0xff]
        %v494 = vld [vmem:[%s2 + $0x20] sm:$0xff]
        %v495 = vld [vmem:[%s2 + $0x28] sm:$0xff]
        %v496 = vld [vmem:[%s2 + $0x30] sm:$0xff]
        %v497 = vld [vmem:[%s2 + $0x38] sm:$0xff]
        %v498 = vld [vmem:[%s2 + $0x40] sm:$0xff]
        %v499 = vld [vmem:[%s2 + $0x48] sm:$0xff]
        %v500 = vld [vmem:[%s2 + $0x50] sm:$0xff]
        %v501 = vld [vmem:[%s2 + $0x58] sm:$0xff]
        %v502 = vld [vmem:[%s2 + $0x60] sm:$0xff]
        %v503 = vld [vmem:[%s2 + $0x68] sm:$0xff]
        %v504 = vld [vmem:[%s2 + $0x70] sm:$0xff]
        %v505 = vld [vmem:[%s2 + $0x78] sm:$0xff]
        %v506 = vld [vmem:[%s2 + $0x80] sm:$0xff]
        %v507 = vld [vmem:[%s2 + $0x88] sm:$0xff]
        %v508 = vld [vmem:[%s2 + $0x90] sm:$0xff]
        %v509 = vld [vmem:[%s2 + $0x98] sm:$0xff]
        %v510 = vld [vmem:[%s2 + $0xa0] sm:$0xff]
        %v511 = vld [vmem:[%s2 + $0xa8] sm:$0xff]
        %v512 = vld [vmem:[%s2 + $0xb0] sm:$0xff]
        %v513 = vld [vmem:[%s2 + $0xb8] sm:$0xff]
        %v514 = vld [vmem:[%s2 + $0xc0] sm:$0xff]
        %v515 = vld [vmem:[%s2 + $0xc8] sm:$0xff]
        %v516 = vld [vmem:[%s2 + $0xd0] sm:$0xff]
        %v517 = vld [vmem:[%s2 + $0xd8] sm:$0xff]
        %v518 = vld [vmem:[%s2 + $0xe0] sm:$0xff]
        %v519 = vld [vmem:[%s2 + $0xe8] sm:$0xff]
        %v520 = vld [vmem:[%s2 + $0xf0] sm:$0xff]
        %v521 = vld [vmem:[%s2 + $0xf8] sm:$0xff]
        %522 = vset.pattern.permute.xlu0 0
        %523 = vperm.xlu0 %522, %v490
        %v524 = vpop.permute.xlu0 %523
        %525 = vset.pattern.permute.xlu0 0
        %526 = vperm.xlu0 %525, %v491
        %v527 = vpop.permute.xlu0 %526
        %528 = vset.pattern.permute.xlu0 0
        %529 = vperm.xlu0 %528, %v492
        %v530 = vpop.permute.xlu0 %529
        %531 = vset.pattern.permute.xlu0 0
        %532 = vperm.xlu0 %531, %v493
        %v533 = vpop.permute.xlu0 %532
        %534 = vset.pattern.permute.xlu0 0
        %535 = vperm.xlu0 %534, %v494
        %v536 = vpop.permute.xlu0 %535
        %537 = vset.pattern.permute.xlu0 0
        %538 = vperm.xlu0 %537, %v495
        %v539 = vpop.permute.xlu0 %538
        %540 = vset.pattern.permute.xlu0 0
        %541 = vperm.xlu0 %540, %v496
        %v542 = vpop.permute.xlu0 %541
        %543 = vset.pattern.permute.xlu0 0
        %544 = vperm.xlu0 %543, %v497
        %v545 = vpop.permute.xlu0 %544
        %546 = vset.pattern.permute.xlu0 0
        %547 = vperm.xlu0 %546, %v498
        %v548 = vpop.permute.xlu0 %547
        %549 = vset.pattern.permute.xlu0 0
        %550 = vperm.xlu0 %549, %v499
        %v551 = vpop.permute.xlu0 %550
        %552 = vset.pattern.permute.xlu0 0
        %553 = vperm.xlu0 %552, %v500
        %v554 = vpop.permute.xlu0 %553
        %555 = vset.pattern.permute.xlu0 0
        %556 = vperm.xlu0 %555, %v501
        %v557 = vpop.permute.xlu0 %556
        %558 = vset.pattern.permute.xlu0 0
        %559 = vperm.xlu0 %558, %v502
        %v560 = vpop.permute.xlu0 %559
        %561 = vset.pattern.permute.xlu0 0
        %562 = vperm.xlu0 %561, %v503
        %v563 = vpop.permute.xlu0 %562
        %564 = vset.pattern.permute.xlu0 0
        %565 = vperm.xlu0 %564, %v504
        %v566 = vpop.permute.xlu0 %565
        %567 = vset.pattern.permute.xlu0 0
        %568 = vperm.xlu0 %567, %v505
        %v569 = vpop.permute.xlu0 %568
        %570 = vset.pattern.permute.xlu0 0
        %571 = vperm.xlu0 %570, %v506
        %v572 = vpop.permute.xlu0 %571
        %573 = vset.pattern.permute.xlu0 0
        %574 = vperm.xlu0 %573, %v507
        %v575 = vpop.permute.xlu0 %574
        %576 = vset.pattern.permute.xlu0 0
        %577 = vperm.xlu0 %576, %v508
        %v578 = vpop.permute.xlu0 %577
        %579 = vset.pattern.permute.xlu0 0
        %580 = vperm.xlu0 %579, %v509
        %v581 = vpop.permute.xlu0 %580
        %582 = vset.pattern.permute.xlu0 0
        %583 = vperm.xlu0 %582, %v510
        %v584 = vpop.permute.xlu0 %583
        %585 = vset.pattern.permute.xlu0 0
        %586 = vperm.xlu0 %585, %v511
        %v587 = vpop.permute.xlu0 %586
        %588 = vset.pattern.permute.xlu0 0
        %589 = vperm.xlu0 %588, %v512
        %v590 = vpop.permute.xlu0 %589
        %591 = vset.pattern.permute.xlu0 0
        %592 = vperm.xlu0 %591, %v513
        %v593 = vpop.permute.xlu0 %592
        %594 = vset.pattern.permute.xlu0 0
        %595 = vperm.xlu0 %594, %v514
        %v596 = vpop.permute.xlu0 %595
        %597 = vset.pattern.permute.xlu0 0
        %598 = vperm.xlu0 %597, %v515
        %v599 = vpop.permute.xlu0 %598
        %600 = vset.pattern.permute.xlu0 0
        %601 = vperm.xlu0 %600, %v516
        %v602 = vpop.permute.xlu0 %601
        %603 = vset.pattern.permute.xlu0 0
        %604 = vperm.xlu0 %603, %v517
        %v605 = vpop.permute.xlu0 %604
        %606 = vset.pattern.permute.xlu0 0
        %607 = vperm.xlu0 %606, %v518
        %v608 = vpop.permute.xlu0 %607
        %609 = vset.pattern.permute.xlu0 0
        %610 = vperm.xlu0 %609, %v519
        %v611 = vpop.permute.xlu0 %610
        %612 = vset.pattern.permute.xlu0 0
        %613 = vperm.xlu0 %612, %v520
        %v614 = vpop.permute.xlu0 %613
        %615 = vset.pattern.permute.xlu0 0
        %616 = vperm.xlu0 %615, %v521
        %v617 = vpop.permute.xlu0 %616
        %vm618 = vcmp.eq.s32.totalorder %v489, %v524
        %vm619 = vcmp.eq.s32.totalorder %v489, %v527
        %vm620 = vcmp.eq.s32.totalorder %v489, %v530
        %vm621 = vcmp.eq.s32.totalorder %v489, %v533
        %vm622 = vcmp.eq.s32.totalorder %v489, %v536
        %vm623 = vcmp.eq.s32.totalorder %v489, %v539
        %vm624 = vcmp.eq.s32.totalorder %v489, %v542
        %vm625 = vcmp.eq.s32.totalorder %v489, %v545
        %vm626 = vcmp.eq.s32.totalorder %v489, %v548
        %vm627 = vcmp.eq.s32.totalorder %v489, %v551
        %vm628 = vcmp.eq.s32.totalorder %v489, %v554
        %vm629 = vcmp.eq.s32.totalorder %v489, %v557
        %vm630 = vcmp.eq.s32.totalorder %v489, %v560
        %vm631 = vcmp.eq.s32.totalorder %v489, %v563
        %vm632 = vcmp.eq.s32.totalorder %v489, %v566
        %vm633 = vcmp.eq.s32.totalorder %v489, %v569
        %vm634 = vcmp.eq.s32.totalorder %v489, %v572
        %vm635 = vcmp.eq.s32.totalorder %v489, %v575
        %vm636 = vcmp.eq.s32.totalorder %v489, %v578
        %vm637 = vcmp.eq.s32.totalorder %v489, %v581
        %vm638 = vcmp.eq.s32.totalorder %v489, %v584
        %vm639 = vcmp.eq.s32.totalorder %v489, %v587
        %vm640 = vcmp.eq.s32.totalorder %v489, %v590
        %vm641 = vcmp.eq.s32.totalorder %v489, %v593
        %vm642 = vcmp.eq.s32.totalorder %v489, %v596
        %vm643 = vcmp.eq.s32.totalorder %v489, %v599
        %vm644 = vcmp.eq.s32.totalorder %v489, %v602
        %vm645 = vcmp.eq.s32.totalorder %v489, %v605
        %vm646 = vcmp.eq.s32.totalorder %v489, %v608
        %vm647 = vcmp.eq.s32.totalorder %v489, %v611
        %vm648 = vcmp.eq.s32.totalorder %v489, %v614
        %vm649 = vcmp.eq.s32.totalorder %v489, %v617
        %v650 = vsel %vm618, 0.25, 0.0
        %v651 = vsel %vm619, 0.25, 0.0
        %v652 = vsel %vm620, 0.25, 0.0
        %v653 = vsel %vm621, 0.25, 0.0
        %v654 = vsel %vm622, 0.25, 0.0
        %v655 = vsel %vm623, 0.25, 0.0
        %v656 = vsel %vm624, 0.25, 0.0
        %v657 = vsel %vm625, 0.25, 0.0
        %v658 = vsel %vm626, 0.25, 0.0
        %v659 = vsel %vm627, 0.25, 0.0
        %v660 = vsel %vm628, 0.25, 0.0
        %v661 = vsel %vm629, 0.25, 0.0
        %v662 = vsel %vm630, 0.25, 0.0
        %v663 = vsel %vm631, 0.25, 0.0
        %v664 = vsel %vm632, 0.25, 0.0
        %v665 = vsel %vm633, 0.25, 0.0
        %v666 = vsel %vm634, 0.25, 0.0
        %v667 = vsel %vm635, 0.25, 0.0
        %v668 = vsel %vm636, 0.25, 0.0
        %v669 = vsel %vm637, 0.25, 0.0
        %v670 = vsel %vm638, 0.25, 0.0
        %v671 = vsel %vm639, 0.25, 0.0
        %v672 = vsel %vm640, 0.25, 0.0
        %v673 = vsel %vm641, 0.25, 0.0
        %v674 = vsel %vm642, 0.25, 0.0
        %v675 = vsel %vm643, 0.25, 0.0
        %v676 = vsel %vm644, 0.25, 0.0
        %v677 = vsel %vm645, 0.25, 0.0
        %v678 = vsel %vm646, 0.25, 0.0
        %v679 = vsel %vm647, 0.25, 0.0
        %v680 = vsel %vm648, 0.25, 0.0
        %v681 = vsel %vm649, 0.25, 0.0
        %v682 = vld [vmem:[#allocation4] sm:$0xff]
        %v683 = vld [vmem:[#allocation4 + $0x8] sm:$0xff]
        %v684 = vld [vmem:[#allocation4 + $0x10] sm:$0xff]
        %v685 = vld [vmem:[#allocation4 + $0x18] sm:$0xff]
        %v686 = vld [vmem:[#allocation4 + $0x20] sm:$0xff]
        %v687 = vld [vmem:[#allocation4 + $0x28] sm:$0xff]
        %v688 = vld [vmem:[#allocation4 + $0x30] sm:$0xff]
        %v689 = vld [vmem:[#allocation4 + $0x38] sm:$0xff]
        %v690 = vld [vmem:[#allocation4 + $0x40] sm:$0xff]
        %v691 = vld [vmem:[#allocation4 + $0x48] sm:$0xff]
        %v692 = vld [vmem:[#allocation4 + $0x50] sm:$0xff]
        %v693 = vld [vmem:[#allocation4 + $0x58] sm:$0xff]
        %v694 = vld [vmem:[#allocation4 + $0x60] sm:$0xff]
        %v695 = vld [vmem:[#allocation4 + $0x68] sm:$0xff]
        %v696 = vld [vmem:[#allocation4 + $0x70] sm:$0xff]
        %v697 = vld [vmem:[#allocation4 + $0x78] sm:$0xff]
        %698 = vmatprep.subr.mxu0 0.0
        %699 = vmatpush1.msra.mxu0 %v682
        %700 = vmatprep.subr.mxu0 0.0
        %701 = vmatpush1.msra.mxu0 %v683
        %702 = vmatprep.subr.mxu0 0.0
        %703 = vmatpush1.msra.mxu0 %v684
        %704 = vmatprep.subr.mxu0 0.0
        %705 = vmatpush1.msra.mxu0 %v685
        %706 = vmatprep.subr.mxu0 0.0
        %707 = vmatpush1.msra.mxu0 %v686
        %708 = vmatprep.subr.mxu0 0.0
        %709 = vmatpush1.msra.mxu0 %v687
        %710 = vmatprep.subr.mxu0 0.0
        %711 = vmatpush1.msra.mxu0 %v688
        %712 = vmatprep.subr.mxu0 0.0
        %713 = vmatpush1.msra.mxu0 %v689
        %714 = vmatprep.subr.mxu0 0.0
        %715 = vmatpush1.msra.mxu0 %v690
        %716 = vmatprep.subr.mxu0 0.0
        %717 = vmatpush1.msra.mxu0 %v691
        %718 = vmatprep.subr.mxu0 0.0
        %719 = vmatpush1.msra.mxu0 %v692
        %720 = vmatprep.subr.mxu0 0.0
        %721 = vmatpush1.msra.mxu0 %v693
        %722 = vmatprep.subr.mxu0 0.0
        %723 = vmatpush1.msra.mxu0 %v694
        %724 = vmatprep.subr.mxu0 0.0
        %725 = vmatpush1.msra.mxu0 %v695
        %726 = vmatprep.subr.mxu0 0.0
        %727 = vmatpush1.msra.mxu0 %v696
        %728 = vmatprep.subr.mxu0 0.0
        %729 = vmatpush1.msra.mxu0 %v697
        %730 = vmatprep.subr.mxu0 0.0
        %731 = vmatpush1.msra.mxu0 0.0
        %732 = vmatprep.subr.mxu0 0.0
        %733 = vmatpush1.msra.mxu0 0.0
        %734 = vmatprep.subr.mxu0 0.0
        %735 = vmatpush1.msra.mxu0 0.0
        %736 = vmatprep.subr.mxu0 0.0
        %737 = vmatpush1.msra.mxu0 0.0
        %738 = vmatprep.subr.mxu0 0.0
        %739 = vmatpush1.msra.mxu0 0.0
        %740 = vmatprep.subr.mxu0 0.0
        %741 = vmatpush1.msra.mxu0 0.0
        %742 = vmatprep.subr.mxu0 0.0
        %743 = vmatpush1.msra.mxu0 0.0
        %744 = vmatprep.subr.mxu0 0.0
        %745 = vmatpush1.msra.mxu0 0.0
        %746 = vmatprep.subr.mxu0 0.0
        %747 = vmatpush1.msra.mxu0 0.0
        %748 = vmatprep.subr.mxu0 0.0
        %749 = vmatpush1.msra.mxu0 0.0
        %750 = vmatprep.subr.mxu0 0.0
        %751 = vmatpush1.msra.mxu0 0.0
        %752 = vmatprep.subr.mxu0 0.0
        %753 = vmatpush1.msra.mxu0 0.0
        %754 = vmatprep.subr.mxu0 0.0
        %755 = vmatpush1.msra.mxu0 0.0
        %756 = vmatprep.subr.mxu0 0.0
        %757 = vmatpush1.msra.mxu0 0.0
        %758 = vmatprep.subr.mxu0 0.0
        %759 = vmatpush1.msra.mxu0 0.0
        %760 = vmatprep.subr.mxu0 0.0
        %761 = vmatpush1.msra.mxu0 0.0
        %762 = vmatprep.mubr.f32.mxu0 0.0
        %763 = vmatmul.mubr.f32.gmra.mrb[0].mxu0 %v650
        %v764 = vpop.f32.mrb[0].mxu0
        %v765 = vadd.f32 0.0, %v764
        %v766 = vpop.f32.mrb[0].mxu0
        %767 = vmatprep.mubr.f32.mxu0 0.0
        %768 = vmatmul.mubr.f32.gmra.mrb[0].mxu0 %v651
        %v769 = vpop.f32.mrb[0].mxu0
        %v770 = vadd.f32 0.0, %v769
        %v771 = vpop.f32.mrb[0].mxu0
        %772 = vmatprep.mubr.f32.mxu0 0.0
        %773 = vmatmul.mubr.f32.gmra.mrb[0].mxu0 %v652
        %v774 = vpop.f32.mrb[0].mxu0
        %v775 = vadd.f32 0.0, %v774
        %v776 = vpop.f32.mrb[0].mxu0
        %777 = vmatprep.mubr.f32.mxu0 0.0
        %778 = vmatmul.mubr.f32.gmra.mrb[0].mxu0 %v653
        %v779 = vpop.f32.mrb[0].mxu0
        %v780 = vadd.f32 0.0, %v779
        %v781 = vpop.f32.mrb[0].mxu0
        %782 = vmatprep.mubr.f32.mxu0 0.0
        %783 = vmatmul.mubr.f32.gmra.mrb[0].mxu0 %v654
        %v784 = vpop.f32.mrb[0].mxu0
        %v785 = vadd.f32 0.0, %v784
        %v786 = vpop.f32.mrb[0].mxu0
        %787 = vmatprep.mubr.f32.mxu0 0.0
        %788 = vmatmul.mubr.f32.gmra.mrb[0].mxu0 %v655
        %v789 = vpop.f32.mrb[0].mxu0
        %v790 = vadd.f32 0.0, %v789
        %v791 = vpop.f32.mrb[0].mxu0
        %792 = vmatprep.mubr.f32.mxu0 0.0
        %793 = vmatmul.mubr.f32.gmra.mrb[0].mxu0 %v656
        %v794 = vpop.f32.mrb[0].mxu0
        %v795 = vadd.f32 0.0, %v794
        %v796 = vpop.f32.mrb[0].mxu0
        %797 = vmatprep.mubr.f32.mxu0 0.0
        %798 = vmatmul.mubr.f32.gmra.mrb[0].mxu0 %v657
        %v799 = vpop.f32.mrb[0].mxu0
        %v800 = vadd.f32 0.0, %v799
        %v801 = vpop.f32.mrb[0].mxu0
        %802 = vmatprep.mubr.f32.mxu0 0.0
        %803 = vmatmul.mubr.f32.gmra.mrb[0].mxu0 %v658
        %v804 = vpop.f32.mrb[0].mxu0
        %v805 = vadd.f32 0.0, %v804
        %v806 = vpop.f32.mrb[0].mxu0
        %807 = vmatprep.mubr.f32.mxu0 0.0
        %808 = vmatmul.mubr.f32.gmra.mrb[0].mxu0 %v659
        %v809 = vpop.f32.mrb[0].mxu0
        %v810 = vadd.f32 0.0, %v809
        %v811 = vpop.f32.mrb[0].mxu0
        %812 = vmatprep.mubr.f32.mxu0 0.0
        %813 = vmatmul.mubr.f32.gmra.mrb[0].mxu0 %v660
        %v814 = vpop.f32.mrb[0].mxu0
        %v815 = vadd.f32 0.0, %v814
        %v816 = vpop.f32.mrb[0].mxu0
        %817 = vmatprep.mubr.f32.mxu0 0.0
        %818 = vmatmul.mubr.f32.gmra.mrb[0].mxu0 %v661
        %v819 = vpop.f32.mrb[0].mxu0
        %v820 = vadd.f32 0.0, %v819
        %v821 = vpop.f32.mrb[0].mxu0
        %822 = vmatprep.mubr.f32.mxu0 0.0
        %823 = vmatmul.mubr.f32.gmra.mrb[0].mxu0 %v662
        %v824 = vpop.f32.mrb[0].mxu0
        %v825 = vadd.f32 0.0, %v824
        %v826 = vpop.f32.mrb[0].mxu0
        %827 = vmatprep.mubr.f32.mxu0 0.0
        %828 = vmatmul.mubr.f32.gmra.mrb[0].mxu0 %v663
        %v829 = vpop.f32.mrb[0].mxu0
        %v830 = vadd.f32 0.0, %v829
        %v831 = vpop.f32.mrb[0].mxu0
        %832 = vmatprep.mubr.f32.mxu0 0.0
        %833 = vmatmul.mubr.f32.gmra.mrb[0].mxu0 %v664
        %v834 = vpop.f32.mrb[0].mxu0
        %v835 = vadd.f32 0.0, %v834
        %v836 = vpop.f32.mrb[0].mxu0
        %837 = vmatprep.mubr.f32.mxu0 0.0
        %838 = vmatmul.mubr.f32.gmra.mrb[0].mxu0 %v665
        %v839 = vpop.f32.mrb[0].mxu0
        %v840 = vadd.f32 0.0, %v839
        %v841 = vpop.f32.mrb[0].mxu0
        %842 = vmatprep.mubr.f32.mxu0 0.0
        %843 = vmatmul.mubr.f32.gmra.mrb[0].mxu0 %v666
        %v844 = vpop.f32.mrb[0].mxu0
        %v845 = vadd.f32 0.0, %v844
        %v846 = vpop.f32.mrb[0].mxu0
        %847 = vmatprep.mubr.f32.mxu0 0.0
        %848 = vmatmul.mubr.f32.gmra.mrb[0].mxu0 %v667
        %v849 = vpop.f32.mrb[0].mxu0
        %v850 = vadd.f32 0.0, %v849
        %v851 = vpop.f32.mrb[0].mxu0
        %852 = vmatprep.mubr.f32.mxu0 0.0
        %853 = vmatmul.mubr.f32.gmra.mrb[0].mxu0 %v668
        %v854 = vpop.f32.mrb[0].mxu0
        %v855 = vadd.f32 0.0, %v854
        %v856 = vpop.f32.mrb[0].mxu0
        %857 = vmatprep.mubr.f32.mxu0 0.0
        %858 = vmatmul.mubr.f32.gmra.mrb[0].mxu0 %v669
        %v859 = vpop.f32.mrb[0].mxu0
        %v860 = vadd.f32 0.0, %v859
        %v861 = vpop.f32.mrb[0].mxu0
        %862 = vmatprep.mubr.f32.mxu0 0.0
        %863 = vmatmul.mubr.f32.gmra.mrb[0].mxu0 %v670
        %v864 = vpop.f32.mrb[0].mxu0
        %v865 = vadd.f32 0.0, %v864
        %v866 = vpop.f32.mrb[0].mxu0
        %867 = vmatprep.mubr.f32.mxu0 0.0
        %868 = vmatmul.mubr.f32.gmra.mrb[0].mxu0 %v671
        %v869 = vpop.f32.mrb[0].mxu0
        %v870 = vadd.f32 0.0, %v869
        %v871 = vpop.f32.mrb[0].mxu0
        %872 = vmatprep.mubr.f32.mxu0 0.0
        %873 = vmatmul.mubr.f32.gmra.mrb[0].mxu0 %v672
        %v874 = vpop.f32.mrb[0].mxu0
        %v875 = vadd.f32 0.0, %v874
        %v876 = vpop.f32.mrb[0].mxu0
        %877 = vmatprep.mubr.f32.mxu0 0.0
        %878 = vmatmul.mubr.f32.gmra.mrb[0].mxu0 %v673
        %v879 = vpop.f32.mrb[0].mxu0
        %v880 = vadd.f32 0.0, %v879
        %v881 = vpop.f32.mrb[0].mxu0
        %882 = vmatprep.mubr.f32.mxu0 0.0
        %883 = vmatmul.mubr.f32.gmra.mrb[0].mxu0 %v674
        %v884 = vpop.f32.mrb[0].mxu0
        %v885 = vadd.f32 0.0, %v884
        %v886 = vpop.f32.mrb[0].mxu0
        %887 = vmatprep.mubr.f32.mxu0 0.0
        %888 = vmatmul.mubr.f32.gmra.mrb[0].mxu0 %v675
        %v889 = vpop.f32.mrb[0].mxu0
        %v890 = vadd.f32 0.0, %v889
        %v891 = vpop.f32.mrb[0].mxu0
        %892 = vmatprep.mubr.f32.mxu0 0.0
        %893 = vmatmul.mubr.f32.gmra.mrb[0].mxu0 %v676
        %v894 = vpop.f32.mrb[0].mxu0
        %v895 = vadd.f32 0.0, %v894
        %v896 = vpop.f32.mrb[0].mxu0
        %897 = vmatprep.mubr.f32.mxu0 0.0
        %898 = vmatmul.mubr.f32.gmra.mrb[0].mxu0 %v677
        %v899 = vpop.f32.mrb[0].mxu0
        %v900 = vadd.f32 0.0, %v899
        %v901 = vpop.f32.mrb[0].mxu0
        %902 = vmatprep.mubr.f32.mxu0 0.0
        %903 = vmatmul.mubr.f32.gmra.mrb[0].mxu0 %v678
        %v904 = vpop.f32.mrb[0].mxu0
        %v905 = vadd.f32 0.0, %v904
        %v906 = vpop.f32.mrb[0].mxu0
        %907 = vmatprep.mubr.f32.mxu0 0.0
        %908 = vmatmul.mubr.f32.gmra.mrb[0].mxu0 %v679
        %v909 = vpop.f32.mrb[0].mxu0
        %v910 = vadd.f32 0.0, %v909
        %v911 = vpop.f32.mrb[0].mxu0
        %912 = vmatprep.mubr.f32.mxu0 0.0
        %913 = vmatmul.mubr.f32.gmra.mrb[0].mxu0 %v680
        %v914 = vpop.f32.mrb[0].mxu0
        %v915 = vadd.f32 0.0, %v914
        %v916 = vpop.f32.mrb[0].mxu0
        %917 = vmatprep.mubr.f32.mxu0 0.0
        %918 = vmatmul.mubr.f32.gmra.mrb[0].mxu0 %v681
        %v919 = vpop.f32.mrb[0].mxu0
        %v920 = vadd.f32 0.0, %v919
        %v921 = vpop.f32.mrb[0].mxu0
        %922 = vdwg.mxu0
        %v923 = vmul.f32 %v765, %v845
        %v924 = vmul.f32 %v770, %v850
        %v925 = vmul.f32 %v775, %v855
        %v926 = vmul.f32 %v780, %v860
        %v927 = vmul.f32 %v785, %v865
        %v928 = vmul.f32 %v790, %v870
        %v929 = vmul.f32 %v795, %v875
        %v930 = vmul.f32 %v800, %v880
        %v931 = vmul.f32 %v805, %v885
        %v932 = vmul.f32 %v810, %v890
        %v933 = vmul.f32 %v815, %v895
        %v934 = vmul.f32 %v820, %v900
        %v935 = vmul.f32 %v825, %v905
        %v936 = vmul.f32 %v830, %v910
        %v937 = vmul.f32 %v835, %v915
        %v938 = vmul.f32 %v840, %v920
        %939 = vxpose.xlu0.b32.start [1/16] %v923, 128
        %940 = vxpose.xlu0.b32.cont [2/16] %v924, 128
        %941 = vxpose.xlu0.b32.cont [3/16] %v925, 128
        %942 = vxpose.xlu0.b32.cont [4/16] %v926, 128
        %943 = vxpose.xlu0.b32.cont [5/16] %v927, 128
        %944 = vxpose.xlu0.b32.cont [6/16] %v928, 128
        %945 = vxpose.xlu0.b32.cont [7/16] %v929, 128
        %946 = vxpose.xlu0.b32.cont [8/16] %v930, 128
        %947 = vxpose.xlu0.b32.cont [9/16] %v931, 128
        %948 = vxpose.xlu0.b32.cont [10/16] %v932, 128
        %949 = vxpose.xlu0.b32.cont [11/16] %v933, 128
        %950 = vxpose.xlu0.b32.cont [12/16] %v934, 128
        %951 = vxpose.xlu0.b32.cont [13/16] %v935, 128
        %952 = vxpose.xlu0.b32.cont [14/16] %v936, 128
        %953 = vxpose.xlu0.b32.cont [15/16] %v937, 128
        %954 = vxpose.xlu0.b32.end [16/16] %v938, 128
        %v955 = vpop.trf.xlu0
        %v956 = vpop.trf.xlu0
        %v957 = vpop.trf.xlu0
        %v958 = vpop.trf.xlu0
        %v959 = vpop.trf.xlu0
        %v960 = vpop.trf.xlu0
        %v961 = vpop.trf.xlu0
        %v962 = vpop.trf.xlu0
        %v963 = vpop.trf.xlu0
        %v964 = vpop.trf.xlu0
        %v965 = vpop.trf.xlu0
        %v966 = vpop.trf.xlu0
        %v967 = vpop.trf.xlu0
        %v968 = vpop.trf.xlu0
        %v969 = vpop.trf.xlu0
        %v970 = vpop.trf.xlu0
        %v971 = vadd.f32 %v955, %v956
        %v972 = vadd.f32 %v971, %v957
        %v973 = vadd.f32 %v972, %v958
        %v974 = vadd.f32 %v973, %v959
        %v975 = vadd.f32 %v974, %v960
        %v976 = vadd.f32 %v975, %v961
        %v977 = vadd.f32 %v976, %v962
        %v978 = vadd.f32 %v977, %v963
        %v979 = vadd.f32 %v978, %v964
        %v980 = vadd.f32 %v979, %v965
        %v981 = vadd.f32 %v980, %v966
        %v982 = vadd.f32 %v981, %v967
        %v983 = vadd.f32 %v982, %v968
        %v984 = vadd.f32 %v983, %v969
        %v985 = vadd.f32 %v984, %v970
        %v986 = vrot.slane %v985, 4
        %v987 = vadd.f32 %v985, %v986
        %v988 = vrot.slane %v987, 2
        %v989 = vadd.f32 %v987, %v988
        %v990 = vrot.slane %v989, 1
        %v991 = vadd.f32 %v989, %v990
        %992 = vst [vmem:[%s3] sm:$0x1] %v991
      $region44: #{my_lightgcn_forward.1} parent=31 // pred_fallthru
        _
      // Predicated region
      $region45: #{my_lightgcn_forward.1} parent=31 // pred_check
        %p993 = pneg %p107
      $region46: #{my_lightgcn_forward.1} parent=31 // pred_check_branch
        %995 = sbr.rel (%p993) target = $region48
      $region47: #{my_lightgcn_forward.1} parent=31 // pred_region
        _
      $region48: #{my_lightgcn_forward.1} parent=31 // pred_fallthru
        _
      // Predicated region
      $region49: #{my_lightgcn_forward.1} parent=31 // pred_check
        %p996 = pneg %p107
      $region50: #{my_lightgcn_forward.1} parent=31 // pred_check_branch
        %998 = sbr.rel (%p996) target = $region52
      $region51: #{my_lightgcn_forward.1} parent=31 // pred_region
        _
      $region52: #{my_lightgcn_forward.1} parent=31 // pred_fallthru
        _
    $region32: #{my_lightgcn_forward.1} parent=5 // pred_fallthru
      _
    %p999 = scmp.le.s32.totalorder 2, %s9
    // Predicated region
    $region53: #{my_lightgcn_forward.1} parent=5 // pred_check
      %p1000 = pneg %p999
    $region54: #{my_lightgcn_forward.1} parent=5 // pred_check_branch
      %1002 = sbr.rel (%p1000) target = $region56
    $region55: #{my_lightgcn_forward.1} parent=5 // pred_region
      %s1003 = ssub.s32 %s9, 2
    $region56: #{my_lightgcn_forward.1} parent=5 // pred_fallthru
      _
  $region6: #{my_lightgcn_forward.1} parent=0 // loop_footer
    %s13 = sadd.s32 1, %s9
  $region7: #{my_lightgcn_forward.1} parent=0 // loop_footer_branch
    %8 = sbr.rel target = $region3
  $region8: #{my_lightgcn_forward.1} parent=0 // loop_exit
    _

</llo_original>
